<compile_context>
chip_gen: v5e
topology: v5e:2x2
jax: 0.10.0
libtpu: 0.0.40
codegen_flags: <defaults>
</compile_context>

<pallas_src>
import numpy as np
import jax
import jax.numpy as jnp
from jax.experimental import pallas as pl
from jax.experimental.pallas import tpu as pltpu


# ---------------- hparams (small, consistent with the module) ----------------
class HP:
    max_len_seq = 16
    max_len_pad = 16
    min_len_seg = 4
    max_len_seg = 8


def _max_num_seg(hp):
    return hp.max_len_seq // hp.min_len_seg + 1


# ============================ Pallas kernel ============================
def _interp_lnr_kernel(m_ref, x_ref, o_ref):
    """out[b] = M[b] @ x[b] — single batched MXU matmul, nothing else."""
    out = jnp.einsum(
        "btk,bkc->btc",
        m_ref[...],
        x_ref[...].astype(jnp.float32),
        preferred_element_type=jnp.float32,
    )
    o_ref[...] = out.astype(o_ref.dtype)


def _interp_pallas(m, x):
    B, T_out, T_in = m.shape
    _, _, C = x.shape
    out_shape = jax.ShapeDtypeStruct((B, T_out, C), x.dtype)
    bytes_accessed = (
        m.size * m.dtype.itemsize
        + x.size * x.dtype.itemsize
        + B * T_out * C * x.dtype.itemsize
    )
    return pl.pallas_call(
        _interp_lnr_kernel,
        out_shape=out_shape,
        # Gridless: one invocation, whole operands resident in VMEM (<100 KB).
        in_specs=[
            pl.BlockSpec(memory_space=pltpu.MemorySpace.VMEM),
            pl.BlockSpec(memory_space=pltpu.MemorySpace.VMEM),
        ],
        out_specs=pl.BlockSpec(memory_space=pltpu.MemorySpace.VMEM),
        cost_estimate=pl.CostEstimate(
            flops=2 * B * T_out * T_in * C,
            transcendentals=0,
            bytes_accessed=bytes_accessed,
        ),
    )(m, x)


# ============================ JAX glue (index math) ============================
def _scaled_indices(scales, hp):
    """idx_scaled = arange(2*max_len_seg) / scale, per (batch * segment)."""
    idx = jnp.arange(2 * hp.max_len_seg, dtype=jnp.float32)[None, :]
    return idx / scales[:, None]                                  # (B*mns, 2*mls)


def _build_resample_matrix(idx_scaled, len_seq, len_seg, hp, seq_len):
    """Fold gather + lerp + dense re-pack into one matrix M (B, max_len_pad, seq_len).

    M = S @ W where
      W[c, t]   = mask_c * ((t == src_c) * (1-lam_c) + (t == src_c+1) * lam_c)
      S[t, c]   = mask_c * (t == dest_c)          (dest >= max_len_pad never matches
                                                   -> truncation for free)
    Built entirely from metadata; the channel data x never enters the glue.
    """
    B = len_seq.shape[0]
    mns = _max_num_seg(hp)
    T_out = hp.max_len_pad

    idx_fl = jnp.floor(idx_scaled)                                # (B*mns, 2*mls)
    lam = idx_scaled - idx_fl
    idx_mask = idx_fl < (len_seg.astype(jnp.float32)[:, None] - 1.0)

    offset = jnp.cumsum(len_seg.reshape(B, mns), axis=-1)         # segment start offsets
    offset = jnp.concatenate(
        [jnp.zeros((B, 1), offset.dtype), offset[:, :-1]], axis=-1)
    src = idx_fl + offset.reshape(-1, 1).astype(jnp.float32)      # source frame index

    len_seq_rp = jnp.repeat(len_seq, mns).astype(jnp.float32)
    idx_mask_org = src < (len_seq_rp[:, None] - 1.0)              # inside valid sequence
    mask = jnp.logical_and(idx_mask, idx_mask_org).astype(jnp.float32)

    n_cand = mns * idx_scaled.shape[1]
    src_b = src.reshape(B, n_cand).astype(jnp.int32)              # exact (< 2^24)
    lam_b = lam.reshape(B, n_cand)
    msk_b = mask.reshape(B, n_cand)
    dest_b = (jnp.cumsum(msk_b, axis=-1) - msk_b).astype(jnp.int32)  # exclusive cumsum

    # Pre-multiply the validity mask into the lerp weights.
    w_fl = (1.0 - lam_b) * msk_b
    w_cl = lam_b * msk_b

    t_in = jnp.arange(seq_len, dtype=jnp.int32)
    w = (jnp.where(src_b[..., None] == t_in, w_fl[..., None], 0.0)
         + jnp.where(src_b[..., None] + 1 == t_in, w_cl[..., None], 0.0))
    # (B, n_cand, seq_len)

    t_out = jnp.arange(T_out, dtype=jnp.int32)
    s = jnp.where(
        jnp.logical_and(dest_b[:, None, :] == t_out[:, None],
                        msk_b[:, None, :] > 0.0),
        1.0, 0.0)
    # (B, T_out, n_cand)

    return jnp.einsum("btc,bcu->btu", s, w)                       # (B, T_out, seq_len)


def interp_lnr_forward(x, len_seq, idx_scaled, len_seg, hp):
    """Training-mode InterpLnr.forward given pre-drawn randoms (jit-able)."""
    m = _build_resample_matrix(idx_scaled, len_seq, len_seg, hp, x.shape[1])
    return _interp_pallas(m, x)


def interp_lnr(x, len_seq, key, hp, training=True):
    """InterpLnr.forward: identity in eval mode, random segment resampling in training."""
    if not training:
        return x
    batch = x.shape[0]
    mns = _max_num_seg(hp)
    k_scale, k_seg = jax.random.split(key)
    scales = jax.random.uniform(k_scale, (batch * mns,), jnp.float32) + 0.5
    len_seg = jax.random.randint(k_seg, (batch * mns,), hp.min_len_seg, hp.max_len_seg,
                                 dtype=jnp.int32)
    return interp_lnr_forward(x, len_seq, _scaled_indices(scales, hp), len_seg, hp)


# ============================ NumPy reference (PyTorch port) ============================
def _interp_lnr_reference_np(x, len_seq, idx_scaled, len_seg, hp):
    """Direct NumPy port of the PyTorch InterpLnr.forward training path."""
    x = np.asarray(x)
    len_seq = np.asarray(len_seq)
    idx_scaled = np.asarray(idx_scaled)
    len_seg = np.asarray(len_seg)
    B, _, C = x.shape
    mns = _max_num_seg(hp)

    idx_fl = np.floor(idx_scaled)
    lam = idx_scaled - idx_fl
    idx_mask = idx_fl < (len_seg[:, None] - 1)

    offset = np.cumsum(len_seg.reshape(B, mns), axis=-1)
    offset = np.concatenate([np.zeros((B, 1), offset.dtype), offset[:, :-1]], axis=-1)
    idx_org = idx_fl + offset.reshape(-1, 1)

    len_seq_rp = np.repeat(len_seq, mns)
    idx_mask_org = idx_org < (len_seq_rp - 1)[:, None]
    mask = idx_mask & idx_mask_org
    counts = mask.reshape(B, -1).sum(axis=-1)

    index_1 = np.repeat(np.arange(B), counts)
    index_2_fl = idx_org[mask].astype(np.int64)
    y_fl = x[index_1, index_2_fl, :]
    y_cl = x[index_1, index_2_fl + 1, :]
    lam_f = lam[mask][:, None]
    y = (1.0 - lam_f) * y_fl + lam_f * y_cl

    out = np.zeros((B, hp.max_len_pad, C), dtype=x.dtype)
    start = 0
    for b in range(B):
        cnt = int(counts[b])
        seq = y[start:start + cnt]
        start += cnt
        n = min(cnt, hp.max_len_pad)
        out[b, :n, :] = seq[:n]
    return out


# ============================ main ============================
if __name__ == "__main__":
    hp = HP
    key = jax.random.PRNGKey(0)
    kx, ks, kl = jax.random.split(key, 3)

    B, C = 2, 24                      # channels ~ dim_freq(16) + dim_f0(8) style input
    T = hp.max_len_pad
    x = jax.random.normal(kx, (B, T, C), jnp.float32)
    len_seq = jnp.array([hp.max_len_seq, hp.max_len_seq - 5], jnp.int32)

    mns = _max_num_seg(hp)
    scales = jax.random.uniform(ks, (B * mns,), jnp.float32) + 0.5
    len_seg = jax.random.randint(kl, (B * mns,), hp.min_len_seg, hp.max_len_seg,
                                 dtype=jnp.int32)
    idx_scaled = _scaled_indices(scales, hp)   # shared by kernel path and NumPy reference

    fwd = jax.jit(lambda a, ls, isc, lsg: interp_lnr_forward(a, ls, isc, lsg, hp))
    out = fwd(x, len_seq, idx_scaled, len_seg)
    jax.block_until_ready(out)

    assert out.shape == (B, hp.max_len_pad, C), out.shape
    assert bool(jnp.all(jnp.isfinite(out)))

    ref = _interp_lnr_reference_np(x, len_seq, idx_scaled, len_seg, hp)
    np.testing.assert_allclose(np.asarray(out), ref, rtol=5e-2, atol=5e-2)

    # convenience wrapper (draws its own randoms), training mode
    out2 = jax.jit(lambda a, ls: interp_lnr(a, ls, jax.random.PRNGKey(1), hp,
                                            training=True))(x, len_seq)
    jax.block_until_ready(out2)
    assert out2.shape == (B, hp.max_len_pad, C)

    # eval-mode path: module is the identity
    out_eval = interp_lnr(x, len_seq, key, hp, training=False)
    assert bool(jnp.array_equal(out_eval, x))

    print("KERNEL_OK")
</pallas_src>

<mosaic_0001>
module attributes {stable_mosaic.version = 11 : i64} {
  func.func @_interp_lnr_kernel(%arg0: memref<2x16x16xf32, #tpu.memory_space<vmem>>, %arg1: memref<2x16x24xf32, #tpu.memory_space<vmem>>, %arg2: memref<2x16x24xf32, #tpu.memory_space<vmem>>) attributes {dimension_semantics = [], scalar_prefetch = 0 : i64, scratch_operands = 0 : i64, tpu.core_type = #tpu.core_type<tc>} {
    %c0 = arith.constant 0 : index
    %c0_0 = arith.constant 0 : index
    %c0_1 = arith.constant 0 : index
    %0 = vector.load %arg0[%c0, %c0_0, %c0_1] : memref<2x16x16xf32, #tpu.memory_space<vmem>>, vector<2x16x16xf32>
    %c0_2 = arith.constant 0 : index
    %c0_3 = arith.constant 0 : index
    %c0_4 = arith.constant 0 : index
    %1 = vector.load %arg1[%c0_2, %c0_3, %c0_4] : memref<2x16x24xf32, #tpu.memory_space<vmem>>, vector<2x16x24xf32>
    "tpu.trace_start"() <{level = 10 : i32, message = "btk,bkc->btc"}> : () -> ()
    %cst = arith.constant dense<0.000000e+00> : vector<2x16x24xf32>
    %2 = tpu.matmul %0, %1, %cst {dimension_numbers = #tpu.dot_dimension_numbers<[2], [1], [1], [2], [0, 0, 0, 1, 1, 2], [0], [0]>} : vector<2x16x16xf32>, vector<2x16x24xf32>, vector<2x16x24xf32> -> vector<2x16x24xf32>
    "tpu.trace_stop"() : () -> ()
    %c0_5 = arith.constant 0 : index
    %c0_6 = arith.constant 0 : index
    %c0_7 = arith.constant 0 : index
    %3 = vector.load %arg2[%c0_5, %c0_6, %c0_7] : memref<2x16x24xf32, #tpu.memory_space<vmem>>, vector<2x16x24xf32>
    tpu.vector_store %arg2[%c0_5, %c0_6, %c0_7], %2 {strides = array<i32>} : memref<2x16x24xf32, #tpu.memory_space<vmem>>, vector<2x16x24xf32>,
    return
  }
}

</mosaic_0001>

<llo_original>
// kernel: _lambda_.1
$region0: #{_lambda_.1}
  #allocation0 [shape = 'u32[]', space=smem, size = 0x4, offset = 0x4, fixed_abs, tag = 'smem constant byte address 0x4 - core index']
  #allocation1 [shape = 'u32[72,128]{1,0:T(1,128)}', space=vmem, size = 0x9000, scoped, tag = 'internal scratch']
  %s0 = inlined_call_operand.vmem [shape: f32[2,16,16], index: 0, kind: input, shape index: {}]
  %s1 = inlined_call_operand.vmem [shape: f32[2,16,24], index: 1, kind: input, shape index: {}]
  %s2 = inlined_call_operand.hbm [shape: f32[2,16,24], index: 2, kind: output, shape index: {}]
  %s3 = sld [smem:[#allocation0]]
  $region18: #{_lambda_.1} parent=0
    _
  %s5 = ssub.s32 1, %s3
  %s6 = scalar_select 0, %s5, %s3
  $region1: #{_lambda_.1} parent=0
    #allocation2 [shape = 'u8[16384]{0}', space=vmem, size = 0x4000, scoped, tag = 'output window, operand 0, single buffered']
    #allocation3 [shape = 's32[1]{0}', space=sflag, size = 0x4, scoped, tag = 'scoped memory for _lambda_.1']
    %7 = vsyncpa [#allocation3], 0
    // Predicated region
    $region2: #{_lambda_.1} parent=1 // pred_check
      _
    $region3: #{_lambda_.1} parent=1 // pred_check_branch
      %9 = sbr.rel (0) target = $region5
    $region4: #{_lambda_.1} parent=1 // pred_region
      _
    $region5: #{_lambda_.1} parent=1 // pred_fallthru
      _
    // Predicated region
    $region6: #{_lambda_.1} parent=1 // pred_check
      _
    $region7: #{_lambda_.1} parent=1 // pred_check_branch
      %11 = sbr.rel (0) target = $region9
    $region8: #{_lambda_.1} parent=1 // pred_region
      _
    $region9: #{_lambda_.1} parent=1 // pred_fallthru
      _
    %v12 = vld [vmem:[%s0] sm:$0xff]
    %v13 = vld [vmem:[%s0 + $0x8] sm:$0xff]
    %v14 = vld [vmem:[%s0 + $0x10] sm:$0xff]
    %v15 = vld [vmem:[%s0 + $0x18] sm:$0xff]
    %v16 = vld [vmem:[%s1] sm:$0xff]
    %v17 = vld [vmem:[%s1 + $0x8] sm:$0xff]
    %v18 = vld [vmem:[%s1 + $0x10] sm:$0xff]
    %v19 = vld [vmem:[%s1 + $0x18] sm:$0xff]
    %vm20 = vcmask 130048
    %v22 = vsel %vm20, %v12, 0
    %v25 = vsel %vm20, %v13, 0
    %27 = vmatpush.msra.mxu0 0.0
    %28 = vmatpush.msra.mxu0 0.0
    %29 = vmatpush.msra.mxu0 0.0
    %30 = vmatpush.msra.mxu0 0.0
    %31 = vmatpush.msra.mxu0 0.0
    %32 = vmatpush.msra.mxu0 0.0
    %33 = vmatpush.msra.mxu0 0.0
    %34 = vmatpush.msra.mxu0 0.0
    %35 = vmatpush.msra.mxu0 0.0
    %36 = vmatpush.msra.mxu0 0.0
    %37 = vmatpush.msra.mxu0 0.0
    %38 = vmatpush.msra.mxu0 0.0
    %39 = vmatpush.msra.mxu0 0.0
    %40 = vmatpush.msra.mxu0 0.0
    %41 = vmatpush.msra.mxu0 %v17
    %42 = vmatpush.msra.mxu0 %v16
    %43 = vmatmul.f32.gmra.mxu0 %v22
    %v44 = vpop.f32.mrf.mxu0
    %v45 = vadd.f32 0.0, %v44
    %46 = vmatmul.f32.gmra.mxu0 %v25
    %v47 = vpop.f32.mrf.mxu0
    %v48 = vadd.f32 0.0, %v47
    %49 = vdwg.mxu0
    %v51 = vsel %vm20, %v14, 0
    %v54 = vsel %vm20, %v15, 0
    %56 = vmatpush.msra.mxu0 0.0
    %57 = vmatpush.msra.mxu0 0.0
    %58 = vmatpush.msra.mxu0 0.0
    %59 = vmatpush.msra.mxu0 0.0
    %60 = vmatpush.msra.mxu0 0.0
    %61 = vmatpush.msra.mxu0 0.0
    %62 = vmatpush.msra.mxu0 0.0
    %63 = vmatpush.msra.mxu0 0.0
    %64 = vmatpush.msra.mxu0 0.0
    %65 = vmatpush.msra.mxu0 0.0
    %66 = vmatpush.msra.mxu0 0.0
    %67 = vmatpush.msra.mxu0 0.0
    %68 = vmatpush.msra.mxu0 0.0
    %69 = vmatpush.msra.mxu0 0.0
    %70 = vmatpush.msra.mxu0 %v19
    %71 = vmatpush.msra.mxu0 %v18
    %72 = vmatmul.f32.gmra.mxu0 %v51
    %v73 = vpop.f32.mrf.mxu0
    %v74 = vadd.f32 0.0, %v73
    %75 = vmatmul.f32.gmra.mxu0 %v54
    %v76 = vpop.f32.mrf.mxu0
    %v77 = vadd.f32 0.0, %v76
    %78 = vdwg.mxu0
    %vm79 = vcmask 195584
    %80 = vst.msk [vmem:[#allocation2] sm:$0xff] %vm79, %v45
    %81 = vst.msk [vmem:[#allocation2 + $0x8] sm:$0xff] %vm79, %v48
    %82 = vst.msk [vmem:[#allocation2 + $0x10] sm:$0xff] %vm79, %v74
    %83 = vst.msk [vmem:[#allocation2 + $0x18] sm:$0xff] %vm79, %v77
    // Predicated region
    $region10: #{_lambda_.1} parent=1 // pred_check
      _
    $region11: #{_lambda_.1} parent=1 // pred_check_branch
      %85 = sbr.rel (0) target = $region13
    $region12: #{_lambda_.1} parent=1 // pred_region
      %87 = vsyncadd [#allocation3], 0
      %s88 = sshll.u32 [#allocation2], 4
      %s89 = int_to_ptr.vmem [resolvable:$true] %s88
      %s90 = sshll.u32 %s2, 4
      %s91 = int_to_ptr.hbm [resolvable:$true] %s90
      %96 = dma.vmem_to_hbm [thread:$0]  %s89, 512, %s91, [#allocation3], 128, 128, 8
    $region13: #{_lambda_.1} parent=1 // pred_fallthru
      _
    // Predicated region
    $region14: #{_lambda_.1} parent=1 // pred_check
      _
    $region15: #{_lambda_.1} parent=1 // pred_check_branch
      %98 = sbr.rel (0) target = $region17
    $region16: #{_lambda_.1} parent=1 // pred_region
      %100 = dma.done [#allocation3], 512
    $region17: #{_lambda_.1} parent=1 // pred_fallthru
      _
    %101 = vsyncpa [#allocation3], 1

</llo_original>
